<compile_context>
chip_gen: v5e
topology: v5e:2x2
jax: 0.10.0
libtpu: 0.0.40
codegen_flags: <defaults>
</compile_context>

<pallas_src>
import functools

import jax
import jax.numpy as jnp
from jax import lax
from jax.experimental import pallas as pl
from jax.experimental.pallas import tpu as pltpu


def _round_up(x: int, m: int) -> int:
    return ((x + m - 1) // m) * m


def _choose_tile(dim: int, pref: int, align: int):
    """Pad `dim` to `align` only, then shrink the preferred tile until it
    divides the padded dim.  Returns (tile, padded_dim)."""
    padded = _round_up(max(dim, 1), align)
    t = min(_round_up(pref, align), padded)
    while padded % t != 0:
        t -= align
    return t, padded


def dense_sigmoid_kernel(x_ref, w_ref, b_ref, logits_ref, prob_ref, acc_ref):
    k = pl.program_id(2)

    @pl.when(k == 0)
    def _init():
        acc_ref[...] = jnp.zeros_like(acc_ref)

    # x tile: (tm, tk); w tile: (tn, tk) (nn.Linear layout). Contract K on
    # both operands -> (tm, tn), accumulated in float32 on the MXU.
    acc_ref[...] += lax.dot_general(
        x_ref[...],
        w_ref[...],
        dimension_numbers=(((1,), (1,)), ((), ())),
        preferred_element_type=jnp.float32,
    )

    @pl.when(k == pl.num_programs(2) - 1)
    def _finalize():
        # Epilogue: bias add (VPU) + sigmoid (EUP), in float32, then one
        # lane-dense store per output.
        logits = acc_ref[...] + b_ref[...]          # (1, tn) broadcasts over rows
        prob = jax.nn.sigmoid(logits)
        logits_ref[...] = logits.astype(logits_ref.dtype)
        prob_ref[...] = prob.astype(prob_ref.dtype)


@functools.partial(jax.jit, static_argnames=("tm", "tn", "tk"))
def dense_sigmoid(x, weight, bias, *, tm=256, tn=256, tk=512):
    """Forward pass of DenseSigmoid.

    x:      (..., in_dim)
    weight: (out_dim, in_dim)   -- torch.nn.Linear layout, no wrapper transpose
    bias:   (out_dim,)
    returns [logits, prob], each (..., out_dim).
    """
    *lead, in_dim = x.shape
    out_dim = weight.shape[0]

    # Flatten leading dims like torch.nn.Linear.
    x2 = x.reshape(-1, in_dim)
    B = x2.shape[0]

    # Pick tiles: pad dims only to HW alignment, shrink tiles to divide them.
    tm, Bp = _choose_tile(B, tm, 8)        # sublanes
    tn, Np = _choose_tile(out_dim, tn, 128)  # lanes / MXU
    tk, Kp = _choose_tile(in_dim, tk, 128)   # lanes / MXU

    # Zero-padding is semantics-preserving: padded K columns contribute 0 to
    # the dot product; padded rows/cols of the output are sliced away below.
    xp = x2 if (Bp == B and Kp == in_dim) else jnp.pad(
        x2, ((0, Bp - B), (0, Kp - in_dim)))
    wp = weight if (Np == out_dim and Kp == in_dim) else jnp.pad(
        weight, ((0, Np - out_dim), (0, Kp - in_dim)))
    bp = bias if Np == out_dim else jnp.pad(bias, (0, Np - out_dim))
    bp = bp.reshape(1, Np)

    grid = (Bp // tm, Np // tn, Kp // tk)

    # Outputs keep x.dtype (matches the PyTorch module); accumulation and the
    # sigmoid epilogue are float32 regardless.
    out_dtype = x.dtype
    esize = jnp.dtype(out_dtype).itemsize

    cost = pl.CostEstimate(
        flops=2 * Bp * Kp * Np,
        transcendentals=Bp * Np,
        bytes_accessed=esize * (Bp * Kp + Np * Kp + Np + 2 * Bp * Np),
    )

    logits_p, prob_p = pl.pallas_call(
        dense_sigmoid_kernel,
        out_shape=(
            jax.ShapeDtypeStruct((Bp, Np), out_dtype),
            jax.ShapeDtypeStruct((Bp, Np), out_dtype),
        ),
        grid_spec=pltpu.PrefetchScalarGridSpec(
            num_scalar_prefetch=0,
            grid=grid,
            in_specs=[
                pl.BlockSpec((tm, tk), lambda i, j, k: (i, k)),  # x
                pl.BlockSpec((tn, tk), lambda i, j, k: (j, k)),  # weight (out,in)
                pl.BlockSpec((1, tn), lambda i, j, k: (0, j)),   # bias
            ],
            out_specs=(
                pl.BlockSpec((tm, tn), lambda i, j, k: (i, j)),  # logits
                pl.BlockSpec((tm, tn), lambda i, j, k: (i, j)),  # prob
            ),
            scratch_shapes=[pltpu.VMEM((tm, tn), jnp.float32)],
        ),
        compiler_params=pltpu.CompilerParams(
            dimension_semantics=("parallel", "parallel", "arbitrary"),
        ),
        cost_estimate=cost,
    )(xp, wp, bp)

    logits = logits_p[:B, :out_dim].reshape(*lead, out_dim)
    prob = prob_p[:B, :out_dim].reshape(*lead, out_dim)
    return [logits, prob]


def _reference(x, weight, bias):
    logits = x @ weight.T + bias
    return logits, jax.nn.sigmoid(logits)


if __name__ == "__main__":
    key = jax.random.PRNGKey(0)

    # --- small shape consistent with the module: batch=8, in_dim=32, out_dim=16
    B, IN_DIM, OUT_DIM = 8, 32, 16
    kx, kw, kb, k2x, k2w, k2b = jax.random.split(key, 6)

    bound = 1.0 / jnp.sqrt(jnp.float32(IN_DIM))
    x = jax.random.normal(kx, (B, IN_DIM), dtype=jnp.float32)
    weight = jax.random.uniform(kw, (OUT_DIM, IN_DIM), minval=-bound,
                                maxval=bound, dtype=jnp.float32)
    bias = jax.random.uniform(kb, (OUT_DIM,), minval=-bound, maxval=bound,
                              dtype=jnp.float32)

    logits, prob = dense_sigmoid(x, weight, bias)
    jax.block_until_ready(logits)
    jax.block_until_ready(prob)

    ref_logits, ref_prob = _reference(x, weight, bias)
    assert jnp.allclose(logits, ref_logits, atol=1e-5, rtol=1e-5)
    assert jnp.allclose(prob, ref_prob, atol=1e-5, rtol=1e-5)

    # --- a larger shape exercising the multi-tile grid / K reduction path and
    #     the non-tile-multiple padding logic (320 -> padded 384, tn=128).
    B2, IN2, OUT2 = 512, 384, 320
    bound2 = 1.0 / jnp.sqrt(jnp.float32(IN2))
    x2 = jax.random.normal(k2x, (B2, IN2), dtype=jnp.float32)
    w2 = jax.random.uniform(k2w, (OUT2, IN2), minval=-bound2, maxval=bound2,
                            dtype=jnp.float32)
    b2 = jax.random.uniform(k2b, (OUT2,), minval=-bound2, maxval=bound2,
                            dtype=jnp.float32)

    logits2, prob2 = dense_sigmoid(x2, w2, b2, tm=128, tn=256, tk=128)
    jax.block_until_ready(logits2)
    jax.block_until_ready(prob2)

    ref_logits2, ref_prob2 = _reference(x2, w2, b2)
    assert jnp.allclose(logits2, ref_logits2, atol=1e-4, rtol=1e-4)
    assert jnp.allclose(prob2, ref_prob2, atol=1e-5, rtol=1e-5)

    print("KERNEL_OK")
</pallas_src>

<mosaic_0001>
module attributes {stable_mosaic.version = 11 : i64} {
  func.func @dense_sigmoid_kernel(%arg0: i32, %arg1: i32, %arg2: i32, %arg3: memref<8x128xf32, #tpu.memory_space<vmem>>, %arg4: memref<128x128xf32, #tpu.memory_space<vmem>>, %arg5: memref<1x128xf32, #tpu.memory_space<vmem>>, %arg6: memref<8x128xf32, #tpu.memory_space<vmem>>, %arg7: memref<8x128xf32, #tpu.memory_space<vmem>>, %arg8: memref<8x128xf32, #tpu.memory_space<vmem>>) attributes {dimension_semantics = [#tpu.dimension_semantics<parallel>, #tpu.dimension_semantics<parallel>, #tpu.dimension_semantics<arbitrary>], iteration_bounds = array<i64: 1, 1, 1>, scalar_prefetch = 0 : i64, scratch_operands = 1 : i64, tpu.core_type = #tpu.core_type<tc>, window_params = [{transform_indices = @transform_0, window_bounds = array<i64: 8, 128>}, {transform_indices = @transform_1, window_bounds = array<i64: 128, 128>}, {transform_indices = @transform_2, window_bounds = array<i64: 1, 128>}, {transform_indices = @transform_3, window_bounds = array<i64: 8, 128>}, {transform_indices = @transform_4, window_bounds = array<i64: 8, 128>}]} {
    %c0_i32 = arith.constant 0 : i32
    %0 = arith.cmpi eq, %arg2, %c0_i32 : i32
    %1 = arith.extui %0 : i1 to i32
    %c0_i32_0 = arith.constant 0 : i32
    %2 = arith.cmpi ne, %1, %c0_i32_0 : i32
    scf.if %2 {
      %cst_10 = arith.constant 0.000000e+00 : f32
      %12 = vector.broadcast %cst_10 : f32 to vector<8x128xf32>
      %c0_11 = arith.constant 0 : index
      %c0_12 = arith.constant 0 : index
      %13 = vector.load %arg8[%c0_11, %c0_12] : memref<8x128xf32, #tpu.memory_space<vmem>>, vector<8x128xf32>
      tpu.vector_store %arg8[%c0_11, %c0_12], %12 {strides = array<i32>} : memref<8x128xf32, #tpu.memory_space<vmem>>, vector<8x128xf32>,
    } else {
    }
    %c0 = arith.constant 0 : index
    %c0_1 = arith.constant 0 : index
    %3 = vector.load %arg8[%c0, %c0_1] : memref<8x128xf32, #tpu.memory_space<vmem>>, vector<8x128xf32>
    %c0_2 = arith.constant 0 : index
    %c0_3 = arith.constant 0 : index
    %4 = vector.load %arg3[%c0_2, %c0_3] : memref<8x128xf32, #tpu.memory_space<vmem>>, vector<8x128xf32>
    %c0_4 = arith.constant 0 : index
    %c0_5 = arith.constant 0 : index
    %5 = vector.load %arg4[%c0_4, %c0_5] : memref<128x128xf32, #tpu.memory_space<vmem>>, vector<128x128xf32>
    %cst = arith.constant dense<0.000000e+00> : vector<8x128xf32>
    %6 = tpu.matmul %4, %5, %cst {dimension_numbers = #tpu.dot_dimension_numbers<[1], [1], [0], [0], [0, 0, 1, 0], [], []>} : vector<8x128xf32>, vector<128x128xf32>, vector<8x128xf32> -> vector<8x128xf32>
    %7 = arith.addf %3, %6 : vector<8x128xf32>
    %c0_6 = arith.constant 0 : index
    %c0_7 = arith.constant 0 : index
    %8 = vector.load %arg8[%c0_6, %c0_7] : memref<8x128xf32, #tpu.memory_space<vmem>>, vector<8x128xf32>
    tpu.vector_store %arg8[%c0_6, %c0_7], %7 {strides = array<i32>} : memref<8x128xf32, #tpu.memory_space<vmem>>, vector<8x128xf32>,
    %c0_i32_8 = arith.constant 0 : i32
    %9 = arith.cmpi eq, %arg2, %c0_i32_8 : i32
    %10 = arith.extui %9 : i1 to i32
    %c0_i32_9 = arith.constant 0 : i32
    %11 = arith.cmpi ne, %10, %c0_i32_9 : i32
    scf.if %11 {
      %c0_10 = arith.constant 0 : index
      %c0_11 = arith.constant 0 : index
      %12 = vector.load %arg8[%c0_10, %c0_11] : memref<8x128xf32, #tpu.memory_space<vmem>>, vector<8x128xf32>
      %c0_12 = arith.constant 0 : index
      %c0_13 = arith.constant 0 : index
      %13 = vector.load %arg5[%c0_12, %c0_13] : memref<1x128xf32, #tpu.memory_space<vmem>>, vector<1x128xf32>
      %14 = vector.broadcast %13 : vector<1x128xf32> to vector<8x128xf32>
      %15 = arith.addf %12, %14 : vector<8x128xf32>
      %16 = arith.negf %15 : vector<8x128xf32>
      %17 = math.exp %16 : vector<8x128xf32>
      %cst_14 = arith.constant 1.000000e+00 : f32
      %18 = vector.broadcast %cst_14 : f32 to vector<8x128xf32>
      %19 = arith.addf %18, %17 : vector<8x128xf32>
      %20 = arith.divf %18, %19 : vector<8x128xf32>
      %c0_15 = arith.constant 0 : index
      %c0_16 = arith.constant 0 : index
      %21 = vector.load %arg6[%c0_15, %c0_16] : memref<8x128xf32, #tpu.memory_space<vmem>>, vector<8x128xf32>
      tpu.vector_store %arg6[%c0_15, %c0_16], %15 {strides = array<i32>} : memref<8x128xf32, #tpu.memory_space<vmem>>, vector<8x128xf32>,
      %c0_17 = arith.constant 0 : index
      %c0_18 = arith.constant 0 : index
      %22 = vector.load %arg7[%c0_17, %c0_18] : memref<8x128xf32, #tpu.memory_space<vmem>>, vector<8x128xf32>
      tpu.vector_store %arg7[%c0_17, %c0_18], %20 {strides = array<i32>} : memref<8x128xf32, #tpu.memory_space<vmem>>, vector<8x128xf32>,
    } else {
    }
    return
  }
  func.func @transform_0(%arg0: i32, %arg1: i32, %arg2: i32) -> (i32, i32) {
    %c0_i32 = arith.constant 0 : i32
    return %arg0, %arg2 : i32, i32
  }
  func.func @transform_1(%arg0: i32, %arg1: i32, %arg2: i32) -> (i32, i32) {
    %c0_i32 = arith.constant 0 : i32
    return %arg1, %arg2 : i32, i32
  }
  func.func @transform_2(%arg0: i32, %arg1: i32, %arg2: i32) -> (i32, i32) {
    %c0_i32 = arith.constant 0 : i32
    %c0_i32_0 = arith.constant 0 : i32
    return %c0_i32, %arg1 : i32, i32
  }
  func.func @transform_3(%arg0: i32, %arg1: i32, %arg2: i32) -> (i32, i32) {
    %c0_i32 = arith.constant 0 : i32
    return %arg0, %arg1 : i32, i32
  }
  func.func @transform_4(%arg0: i32, %arg1: i32, %arg2: i32) -> (i32, i32) {
    %c0_i32 = arith.constant 0 : i32
    return %arg0, %arg1 : i32, i32
  }
}

</mosaic_0001>

<llo_original>
// kernel: dense_sigmoid.1
$region0: #{dense_sigmoid.1}
  #allocation0 [shape = 'u32[]', space=smem, size = 0x4, offset = 0x4, fixed_abs, tag = 'smem constant byte address 0x4 - core index']
  #allocation1 [shape = 'u32[72,128]{1,0:T(1,128)}', space=vmem, size = 0x9000, scoped, tag = 'internal scratch']
  #allocation2 [shape = 'f32[8,128]{1,0:T(8,128)}', space=vmem, size = 0x1000, scoped, tag = 'scratch operand']
  %s0 = inlined_call_operand.vmem [shape: f32[8,128], index: 0, kind: input, shape index: {}]
  %s1 = inlined_call_operand.vmem [shape: f32[128,128], index: 1, kind: input, shape index: {}]
  %s2 = inlined_call_operand.vmem [shape: f32[1,128], index: 2, kind: input, shape index: {}]
  %s3 = inlined_call_operand.hbm [shape: f32[8,128], index: 3, kind: output, shape index: {0}]
  %s4 = inlined_call_operand.hbm [shape: f32[8,128], index: 4, kind: output, shape index: {1}]
  %5 = xla_tuple %s3, %s4
  %s6 = sld [smem:[#allocation0]]
  $region38: #{dense_sigmoid.1} parent=0
    _
  %s8 = ssub.s32 1, %s6
  %s9 = scalar_select 0, %s8, %s6
  $region1: #{dense_sigmoid.1} parent=0
    #allocation3 [shape = 'u8[4096]{0}', space=vmem, size = 0x1000, scoped, tag = 'output window, operand 0, single buffered']
    #allocation4 [shape = 's32[1]{0}', space=sflag, size = 0x4, scoped, tag = 'scoped memory for dense_sigmoid.1']
    #allocation5 [shape = 'u8[4096]{0}', space=vmem, size = 0x1000, scoped, tag = 'output window, operand 1, single buffered']
    #allocation6 [shape = 's32[1]{0}', space=sflag, size = 0x4, scoped, tag = 'scoped memory for dense_sigmoid.1']
    %10 = vsyncpa [#allocation4], 0
    %11 = vsyncpa [#allocation6], 0
    // Predicated region
    $region2: #{dense_sigmoid.1} parent=1 // pred_check
      _
    $region3: #{dense_sigmoid.1} parent=1 // pred_check_branch
      %13 = sbr.rel (0) target = $region5
    $region4: #{dense_sigmoid.1} parent=1 // pred_region
      _
    $region5: #{dense_sigmoid.1} parent=1 // pred_fallthru
      _
    // Predicated region
    $region6: #{dense_sigmoid.1} parent=1 // pred_check
      _
    $region7: #{dense_sigmoid.1} parent=1 // pred_check_branch
      %15 = sbr.rel (0) target = $region9
    $region8: #{dense_sigmoid.1} parent=1 // pred_region
      _
    $region9: #{dense_sigmoid.1} parent=1 // pred_fallthru
      _
    // Predicated region
    $region10: #{dense_sigmoid.1} parent=1 // pred_check
      _
    $region11: #{dense_sigmoid.1} parent=1 // pred_check_branch
      %17 = sbr.rel (0) target = $region13
    $region12: #{dense_sigmoid.1} parent=1 // pred_region
      _
    $region13: #{dense_sigmoid.1} parent=1 // pred_fallthru
      _
    %p18 = scmp.eq.s32.totalorder 0, 0
    // Predicated region
    $region14: #{dense_sigmoid.1} parent=1 // pred_check
      %p19 = pneg %p18
    $region15: #{dense_sigmoid.1} parent=1 // pred_check_branch
      %21 = sbr.rel (%p19) target = $region17
    $region16: #{dense_sigmoid.1} parent=1 // pred_region
      %22 = vst [vmem:[#allocation2] sm:$0xff] 0.0
    $region17: #{dense_sigmoid.1} parent=1 // pred_fallthru
      _
    %v23 = vld [vmem:[#allocation2] sm:$0xff]
    %v24 = vld [vmem:[%s0] sm:$0xff]
    %v25 = vld [vmem:[%s1] sm:$0xff]
    %v26 = vld [vmem:[%s1 + $0x8] sm:$0xff]
    %v27 = vld [vmem:[%s1 + $0x10] sm:$0xff]
    %v28 = vld [vmem:[%s1 + $0x18] sm:$0xff]
    %v29 = vld [vmem:[%s1 + $0x20] sm:$0xff]
    %v30 = vld [vmem:[%s1 + $0x28] sm:$0xff]
    %v31 = vld [vmem:[%s1 + $0x30] sm:$0xff]
    %v32 = vld [vmem:[%s1 + $0x38] sm:$0xff]
    %v33 = vld [vmem:[%s1 + $0x40] sm:$0xff]
    %v34 = vld [vmem:[%s1 + $0x48] sm:$0xff]
    %v35 = vld [vmem:[%s1 + $0x50] sm:$0xff]
    %v36 = vld [vmem:[%s1 + $0x58] sm:$0xff]
    %v37 = vld [vmem:[%s1 + $0x60] sm:$0xff]
    %v38 = vld [vmem:[%s1 + $0x68] sm:$0xff]
    %v39 = vld [vmem:[%s1 + $0x70] sm:$0xff]
    %v40 = vld [vmem:[%s1 + $0x78] sm:$0xff]
    %41 = vmatpush.xpose.msra.mxu0 %v40
    %42 = vmatpush.xpose.msra.mxu0 %v39
    %43 = vmatpush.xpose.msra.mxu0 %v38
    %44 = vmatpush.xpose.msra.mxu0 %v37
    %45 = vmatpush.xpose.msra.mxu0 %v36
    %46 = vmatpush.xpose.msra.mxu0 %v35
    %47 = vmatpush.xpose.msra.mxu0 %v34
    %48 = vmatpush.xpose.msra.mxu0 %v33
    %49 = vmatpush.xpose.msra.mxu0 %v32
    %50 = vmatpush.xpose.msra.mxu0 %v31
    %51 = vmatpush.xpose.msra.mxu0 %v30
    %52 = vmatpush.xpose.msra.mxu0 %v29
    %53 = vmatpush.xpose.msra.mxu0 %v28
    %54 = vmatpush.xpose.msra.mxu0 %v27
    %55 = vmatpush.xpose.msra.mxu0 %v26
    %56 = vmatpush.xpose.msra.mxu0 %v25
    %57 = vmatmul.f32.gmra.mxu0 %v24
    %v58 = vpop.f32.mrf.mxu0
    %v59 = vadd.f32 0.0, %v58
    %60 = vdwg.mxu0
    %v61 = vadd.f32 %v23, %v59
    %62 = vst [vmem:[#allocation2] sm:$0xff] %v61
    // Predicated region
    $region18: #{dense_sigmoid.1} parent=1 // pred_check
      %p63 = pneg %p18
    $region19: #{dense_sigmoid.1} parent=1 // pred_check_branch
      %65 = sbr.rel (%p63) target = $region21
    $region20: #{dense_sigmoid.1} parent=1 // pred_region
      %v66 = vld [vmem:[#allocation2] sm:$0xff]
      %v67 = vld [vmem:[%s2] sm:$0x1]
      %v69 = vperm.slane %v67, 0
      %v71 = vadd.f32 %v66, %v69
      %v72 = vxor.u32 %v71, 2147483648
      %v73 = vmul.f32 %v72, 1.442695
      %v74 = vpow.pop %v73
      %v75 = vadd.f32 %v74, 1.0
      %v76 = vrcp.pop %v75
      %v77 = vmul.f32 %v75, %v76
      %v78 = vsub.f32 1.0, %v77
      %v79 = vmul.f32 %v76, %v78
      %v80 = vadd.f32 %v76, %v79
      %vm81 = vweird.f32 %v75
      %vm82 = vweird.f32 %v76
      %vm83 = vmor %vm81, %vm82
      %v84 = vsel %vm83, %v76, %v80
      %v85 = vand.u32 2147483647, %v75
      %vm86 = vcmp.eq.f32.partialorder %v85, 8.507059e+37
      %v87 = vand.u32 %v75, 2147483648
      %v88 = vor.u32 1.1754944e-38, %v87
      %v89 = vsel %vm86, %v88, %v84
      %v90 = vmul.f32 1.0, %v89
      %91 = vst [vmem:[#allocation3] sm:$0xff] %v71
      %92 = vst [vmem:[#allocation5] sm:$0xff] %v90
    $region21: #{dense_sigmoid.1} parent=1 // pred_fallthru
      _
    // Predicated region
    $region22: #{dense_sigmoid.1} parent=1 // pred_check
      _
    $region23: #{dense_sigmoid.1} parent=1 // pred_check_branch
      %94 = sbr.rel (0) target = $region25
    $region24: #{dense_sigmoid.1} parent=1 // pred_region
      %96 = vsyncadd [#allocation4], 0
      %s98 = sshll.u32 [#allocation3], 4
      %s99 = int_to_ptr.vmem [resolvable:$true] %s98
      %s100 = sshll.u32 %s3, 4
      %s101 = int_to_ptr.hbm [resolvable:$true] %s100
      %103 = dma.vmem_to_hbm [thread:$0]  %s99, 128, %s101, [#allocation4]
    $region25: #{dense_sigmoid.1} parent=1 // pred_fallthru
      _
    // Predicated region
    $region26: #{dense_sigmoid.1} parent=1 // pred_check
      _
    $region27: #{dense_sigmoid.1} parent=1 // pred_check_branch
      %105 = sbr.rel (0) target = $region29
    $region28: #{dense_sigmoid.1} parent=1 // pred_region
      %107 = vsyncadd [#allocation6], 0
      %s109 = sshll.u32 [#allocation5], 4
      %s110 = int_to_ptr.vmem [resolvable:$true] %s109
      %s111 = sshll.u32 %s4, 4
      %s112 = int_to_ptr.hbm [resolvable:$true] %s111
      %114 = dma.vmem_to_hbm [thread:$0]  %s110, 128, %s112, [#allocation6]
    $region29: #{dense_sigmoid.1} parent=1 // pred_fallthru
      _
    // Predicated region
    $region30: #{dense_sigmoid.1} parent=1 // pred_check
      _
    $region31: #{dense_sigmoid.1} parent=1 // pred_check_branch
      %116 = sbr.rel (0) target = $region33
    $region32: #{dense_sigmoid.1} parent=1 // pred_region
      %118 = dma.done [#allocation4], 128
    $region33: #{dense_sigmoid.1} parent=1 // pred_fallthru
      _
    // Predicated region
    $region34: #{dense_sigmoid.1} parent=1 // pred_check
      _
    $region35: #{dense_sigmoid.1} parent=1 // pred_check_branch
      %120 = sbr.rel (0) target = $region37
    $region36: #{dense_sigmoid.1} parent=1 // pred_region
      %122 = dma.done [#allocation6], 128
    $region37: #{dense_sigmoid.1} parent=1 // pred_fallthru
      _
    %123 = vsyncpa [#allocation4], 1
    %124 = vsyncpa [#allocation6], 1

</llo_original>
